<compile_context>
chip_gen: v7x
topology: tpu7x:2x2x1
jax: 0.10.0
libtpu: 0.0.40
codegen_flags: <defaults>
</compile_context>

<pallas_src>
import functools

import jax
import jax.numpy as jnp
from jax.experimental import pallas as pl
from jax.experimental.pallas import tpu as pltpu


NUM_LAYERS = 3     # 2 bottleneck GCNConvs + 1 GCNConv classifier
LANE = 128         # lane-dense padded feature width


def _round_up(v, m):
    return ((v + m - 1) // m) * m


def _tpu_info():
    """Best-effort chip-generation query: (preferred row tile, physical VMEM bytes/core)."""
    row_tile = 256                      # v6e/v7x MXU is 2x256^2
    vmem_cap = 64 * 1024 * 1024         # conservative default (v7x per-core VMEM)
    try:
        kind = jax.devices()[0].device_kind.lower()
    except Exception:
        kind = ""
    if "v5 lite" in kind or "v5e" in kind or "v5lite" in kind:
        row_tile = 128                  # v5e MXU is 4x128^2-native
    if any(tag in kind for tag in ("v4", "v5", "v6")):
        vmem_cap = 128 * 1024 * 1024
    try:
        vmem_cap = int(pltpu.get_tpu_info().vmem_capacity_bytes)
    except Exception:
        pass
    return row_tile, vmem_cap


# ---------------------------------------------------------------------------
# Fused 3-layer GCN kernel
#   grid = (layer, row_tile);  both axes sequential (xw ping-pong scratch dependency).
#   Layer l aggregates  A_hat[rows] @ XW_l  (XW_l staged by layer l-1 / the wrapper) and,
#   in its epilogue, stages  XW_{l+1} = act(H_l)[rows] @ W_{l+1}  for the next layer.
# ---------------------------------------------------------------------------
def _fused_cwgcn_kernel(a_ref, xw0_ref, w_ref, b_ref, out_ref, xw_buf, *, tm, a_resident):
    l = pl.program_id(0)   # layer index (sequential dependency)
    i = pl.program_id(1)   # row-tile index

    # Seed ping-pong slot 0 with XW0 = X @ W1 (computed in the wrapper) exactly once.
    @pl.when(jnp.logical_and(l == 0, i == 0))
    def _():
        xw_buf[0] = xw0_ref[...]

    row0 = pl.multiple_of(i * tm, tm)
    if a_resident:
        a_tile = a_ref[pl.ds(row0, tm), :]      # A fully resident; slice current rows
    else:
        a_tile = a_ref[...]                     # A streamed row-tile-by-row-tile

    # Aggregation on the MXU: bf16 operands, f32 accumulation, f32 bias epilogue.
    xw_cur = xw_buf[l & 1]                      # (n_pad, LANE) bf16
    acc = jnp.dot(a_tile, xw_cur, preferred_element_type=jnp.float32)
    h = acc + b_ref[0]                          # (tm, LANE) f32

    # NOTE: padded rows (>= n) of xw_buf hold bias/ReLU(bias) garbage; harmless because the
    # padded COLUMNS of A_hat are zero, so they never reach a real node's output.

    # layer 0: GCNConv -> ReLU -> dropout(eval = identity); stage XW for layer 1.
    @pl.when(l == 0)
    def _():
        hr = jnp.maximum(h, 0.0)
        out_ref[0] = hr.astype(out_ref.dtype)
        xw_buf[1, pl.ds(row0, tm), :] = jnp.dot(
            hr.astype(jnp.bfloat16), w_ref[0],
            preferred_element_type=jnp.float32).astype(jnp.bfloat16)

    # layer 1: GCNConv (no activation — last bottleneck conv); stage XW for the classifier.
    @pl.when(l == 1)
    def _():
        out_ref[0] = h.astype(out_ref.dtype)
        xw_buf[0, pl.ds(row0, tm), :] = jnp.dot(
            h.astype(jnp.bfloat16), w_ref[1],
            preferred_element_type=jnp.float32).astype(jnp.bfloat16)

    # layer 2: GCNConv classifier -> logits.
    @pl.when(l == 2)
    def _():
        out_ref[0] = h.astype(out_ref.dtype)


# ---------------------------------------------------------------------------
# CWGCNBase.forward (mode='node', gnn='gcn', num_layers=2, inference)
# ---------------------------------------------------------------------------
def cwgcn_forward(params, x, a_hat):
    n, in_dim = x.shape
    hid = params["w1"].shape[1]
    ncls = params["wc"].shape[1]
    assert max(in_dim, hid, ncls) <= LANE, "feature dims > 128 need wider padding"

    tm_base, vmem_cap = _tpu_info()
    vmem_limit = max(32 << 20, min(int(vmem_cap * 0.85), 100 << 20))

    # Small graphs: collapse the row axis to a single tile (overhead-bound regime).
    n8 = _round_up(n, 8)
    if n8 <= 256:
        tm = n8
        n_pad = n8
    else:
        tm = tm_base
        n_pad = _round_up(n, tm)
    num_row_tiles = n_pad // tm

    # --- padded bf16 operands ------------------------------------------------
    # Padded rows/cols of A_hat are zero, so padded nodes never influence real outputs.
    a_p = jnp.zeros((n_pad, n_pad), jnp.float32).at[:n, :n].set(a_hat).astype(jnp.bfloat16)

    # Layer-0 feature transform hoisted out of the kernel (no in-kernel dependency).
    xw0 = x @ params["w1"]                                             # (n, hid) f32
    xw0_p = (jnp.zeros((n_pad, LANE), jnp.float32)
             .at[:n, :hid].set(xw0).astype(jnp.bfloat16))

    def pad_w(w):
        return jnp.zeros((LANE, LANE), jnp.float32).at[:w.shape[0], :w.shape[1]].set(w)

    def pad_b(b):
        return jnp.zeros((1, LANE), jnp.float32).at[0, :b.shape[0]].set(b)

    w_all = jnp.stack([pad_w(params["w2"]), pad_w(params["wc"])]).astype(jnp.bfloat16)  # (2,128,128)
    b_all = jnp.stack([pad_b(params["b1"]), pad_b(params["b2"]), pad_b(params["bc"])])  # (3,1,128) f32

    # --- resident vs. row-tiled A_hat (generation / size aware) ---------------
    a_resident_bytes = n_pad * n_pad * 2                     # single-buffered, bf16
    other_bytes = (n_pad * LANE * 2                          # xw0, resident
                   + 2 * n_pad * LANE * 2                    # xw ping-pong scratch
                   + w_all.size * 2 + b_all.size * 4
                   + 2 * tm * LANE * 2                       # double-buffered bf16 out block
                   + (2 << 20))                              # slack
    a_resident = (a_resident_bytes + other_bytes) <= int(0.8 * vmem_limit)

    if a_resident:
        # Constant index map + single buffer: DMA'd to VMEM once, resident across the grid.
        a_spec = pl.BlockSpec((n_pad, n_pad), lambda l, i: (0, 0),
                              pipeline_mode=pl.Buffered(1))
    else:
        # Row-tiled: A re-streamed once per layer (3x HBM reads) but VMEM drops to 2*tm*n_pad.
        a_spec = pl.BlockSpec((tm, n_pad), lambda l, i: (i, 0))

    grid = (NUM_LAYERS, num_row_tiles)

    flops = (NUM_LAYERS * 2 * n_pad * n_pad * LANE            # aggregations
             + (NUM_LAYERS - 1) * 2 * n_pad * LANE * LANE)    # staged XW for layers 1, 2
    bytes_accessed = (a_p.size * 2 * (1 if a_resident else NUM_LAYERS)
                      + xw0_p.size * 2 + w_all.size * 2 + b_all.size * 4
                      + NUM_LAYERS * n_pad * LANE * 2)        # bf16 writeback

    out = pl.pallas_call(
        functools.partial(_fused_cwgcn_kernel, tm=tm, a_resident=a_resident),
        out_shape=jax.ShapeDtypeStruct((NUM_LAYERS, n_pad, LANE), jnp.bfloat16),
        grid_spec=pltpu.PrefetchScalarGridSpec(
            num_scalar_prefetch=0,
            grid=grid,
            in_specs=[
                a_spec,
                # XW0 = X @ W1 (bf16), resident, single-buffered.
                pl.BlockSpec((n_pad, LANE), lambda l, i: (0, 0),
                             pipeline_mode=pl.Buffered(1)),
                # [W2, Wc] stack (bf16), resident, single-buffered (96 KiB).
                pl.BlockSpec((2, LANE, LANE), lambda l, i: (0, 0, 0),
                             pipeline_mode=pl.Buffered(1)),
                # per-layer bias (f32), tiny, re-fetched when the layer changes.
                pl.BlockSpec((1, 1, LANE), lambda l, i: (l, 0, 0)),
            ],
            # one lane-dense (tm, 128) bf16 slab per (layer, row_tile): written exactly once.
            out_specs=pl.BlockSpec((1, tm, LANE), lambda l, i: (l, i, 0)),
            scratch_shapes=[
                pltpu.VMEM((2, n_pad, LANE), jnp.bfloat16),   # XW ping-pong buffer
            ],
        ),
        compiler_params=pltpu.CompilerParams(
            # Layer axis is a true sequential dependency; the row axis shares the XW
            # ping-pong scratch across tiles, so it must also stay sequential (do NOT mark
            # parallel/core_parallel without moving xw_buf to a shared space + barrier).
            dimension_semantics=("arbitrary", "arbitrary"),
            vmem_limit_bytes=vmem_limit,
        ),
        cost_estimate=pl.CostEstimate(
            flops=flops, transcendentals=0, bytes_accessed=bytes_accessed),
    )(a_p, xw0_p, w_all, b_all)

    h1 = out[0, :n, :hid].astype(jnp.float32)
    h2 = out[1, :n, :hid].astype(jnp.float32)
    logits = out[2, :n, :ncls].astype(jnp.float32)
    return logits, [h1, h2]


# ---------------------------------------------------------------------------
# Glue: dense normalized adjacency (scatter-add, plain JAX — no Pallas gather)
# ---------------------------------------------------------------------------
def normalized_adjacency(edge_index, num_nodes, edge_weight=None):
    src, dst = edge_index[0], edge_index[1]
    if edge_weight is None:
        edge_weight = jnp.ones(src.shape[0], dtype=jnp.float32)
    a = jnp.zeros((num_nodes, num_nodes), dtype=jnp.float32)
    # message flows src -> dst, aggregated at dst (row = target)
    a = a.at[dst, src].add(edge_weight)
    a = a + jnp.eye(num_nodes, dtype=jnp.float32)  # add self loops
    deg = jnp.sum(a, axis=1)
    d_inv_sqrt = jnp.where(deg > 0, 1.0 / jnp.sqrt(deg), 0.0)
    return d_inv_sqrt[:, None] * a * d_inv_sqrt[None, :]


# ---------------------------------------------------------------------------
# Parameter init (deterministic, glorot-ish) — synthetic, no checkpoint load
# ---------------------------------------------------------------------------
def init_params(key, in_dim, hid_dim, num_classes):
    def glorot(k, fan_in, fan_out):
        scale = jnp.sqrt(6.0 / (fan_in + fan_out))
        return jax.random.uniform(k, (fan_in, fan_out), jnp.float32, -scale, scale)

    k1, k2, k3 = jax.random.split(key, 3)
    return {
        "w1": glorot(k1, in_dim, hid_dim),
        "b1": jnp.zeros((hid_dim,), jnp.float32),
        "w2": glorot(k2, hid_dim, hid_dim),
        "b2": jnp.zeros((hid_dim,), jnp.float32),
        "wc": glorot(k3, hid_dim, num_classes),
        "bc": jnp.zeros((num_classes,), jnp.float32),
    }


def _reference_forward(params, x, a_hat):
    h1 = jax.nn.relu(a_hat @ (x @ params["w1"]) + params["b1"])
    h2 = a_hat @ (h1 @ params["w2"]) + params["b2"]
    logits = a_hat @ (h2 @ params["wc"]) + params["bc"]
    return logits, [h1, h2]


if __name__ == "__main__":
    key = jax.random.PRNGKey(0)
    k_x, k_src, k_dst, k_p = jax.random.split(key, 4)

    N, E = 64, 256
    in_dim, hid_dim, num_classes = 16, 32, 4

    x = jax.random.normal(k_x, (N, in_dim), dtype=jnp.float32)
    src = jax.random.randint(k_src, (E,), 0, N)
    dst = jax.random.randint(k_dst, (E,), 0, N)
    edge_index = jnp.stack([src, dst], axis=0)

    a_hat = normalized_adjacency(edge_index, N)          # [N, N] dense normalized adj
    params = init_params(k_p, in_dim, hid_dim, num_classes)

    logits, x_list = jax.jit(cwgcn_forward)(params, x, a_hat)
    jax.block_until_ready(logits)
    jax.block_until_ready(x_list)

    assert logits.shape == (N, num_classes)
    assert x_list[0].shape == (N, hid_dim) and x_list[1].shape == (N, hid_dim)

    # Loose numeric sanity check vs. the f32 reference (kernel uses bf16 MXU operands and
    # bf16 writeback with f32 accumulation, so small deviations are expected).
    ref_logits, _ = _reference_forward(params, x, a_hat)
    err = float(jnp.max(jnp.abs(logits - ref_logits)))
    assert err < 0.2, f"logits mismatch vs reference: max abs err {err}"

    print("KERNEL_OK")
</pallas_src>

<mosaic_0001>
module attributes {stable_mosaic.version = 11 : i64} {
  func.func @_fused_cwgcn_kernel(%arg0: i32, %arg1: i32, %arg2: memref<64x64xbf16, #tpu.memory_space<vmem>>, %arg3: memref<64x128xbf16, #tpu.memory_space<vmem>>, %arg4: memref<2x128x128xbf16, #tpu.memory_space<vmem>>, %arg5: memref<1x1x128xf32, #tpu.memory_space<vmem>>, %arg6: memref<1x64x128xbf16, #tpu.memory_space<vmem>>, %arg7: memref<2x64x128xbf16, #tpu.memory_space<vmem>>) attributes {dimension_semantics = [#tpu.dimension_semantics<arbitrary>, #tpu.dimension_semantics<arbitrary>], iteration_bounds = array<i64: 3, 1>, scalar_prefetch = 0 : i64, scratch_operands = 1 : i64, tpu.core_type = #tpu.core_type<tc>, window_params = [{pipeline_mode = #tpu.pipeline_mode<synchronous>, transform_indices = @transform_0, window_bounds = array<i64: 64, 64>}, {pipeline_mode = #tpu.pipeline_mode<synchronous>, transform_indices = @transform_1, window_bounds = array<i64: 64, 128>}, {pipeline_mode = #tpu.pipeline_mode<synchronous>, transform_indices = @transform_2, window_bounds = array<i64: 2, 128, 128>}, {transform_indices = @transform_3, window_bounds = array<i64: 1, 1, 128>}, {transform_indices = @transform_4, window_bounds = array<i64: 1, 64, 128>}]} {
    %c0_i32 = arith.constant 0 : i32
    %0 = arith.cmpi eq, %arg0, %c0_i32 : i32
    %c0_i32_0 = arith.constant 0 : i32
    %1 = arith.cmpi eq, %arg1, %c0_i32_0 : i32
    %2 = arith.andi %0, %1 : i1
    %3 = arith.extui %2 : i1 to i32
    %c0_i32_1 = arith.constant 0 : i32
    %4 = arith.cmpi ne, %3, %c0_i32_1 : i32
    scf.if %4 {
      %c0_12 = arith.constant 0 : index
      %c0_13 = arith.constant 0 : index
      %27 = vector.load %arg3[%c0_12, %c0_13] : memref<64x128xbf16, #tpu.memory_space<vmem>>, vector<64x128xbf16>
      %c0_14 = arith.constant 0 : index
      %c0_15 = arith.constant 0 : index
      %c0_16 = arith.constant 0 : index
      %28 = vector.load %arg7[%c0_14, %c0_15, %c0_16] : memref<2x64x128xbf16, #tpu.memory_space<vmem>>, vector<1x64x128xbf16>
      %29 = vector.shape_cast %28 : vector<1x64x128xbf16> to vector<64x128xbf16>
      %30 = vector.shape_cast %27 : vector<64x128xbf16> to vector<1x64x128xbf16>
      tpu.vector_store %arg7[%c0_14, %c0_15, %c0_16], %30 {strides = array<i32>} : memref<2x64x128xbf16, #tpu.memory_space<vmem>>, vector<1x64x128xbf16>,
    } else {
    }
    %c64_i32 = arith.constant 64 : i32
    %5 = arith.muli %arg1, %c64_i32 : i32
    %6 = tpu.assume_multiple %5, 64 : i32
    %7 = arith.index_cast %6 : i32 to index
    %c0 = arith.constant 0 : index
    %8 = vector.load %arg2[%7, %c0] : memref<64x64xbf16, #tpu.memory_space<vmem>>, vector<64x64xbf16>
    %c1_i32 = arith.constant 1 : i32
    %9 = arith.andi %arg0, %c1_i32 : i32
    %10 = arith.index_cast %9 : i32 to index
    %c0_2 = arith.constant 0 : index
    %c0_3 = arith.constant 0 : index
    %11 = vector.load %arg7[%10, %c0_2, %c0_3] : memref<2x64x128xbf16, #tpu.memory_space<vmem>>, vector<1x64x128xbf16>
    %12 = vector.shape_cast %11 : vector<1x64x128xbf16> to vector<64x128xbf16>
    %cst = arith.constant dense<0.000000e+00> : vector<64x128xf32>
    %13 = tpu.matmul %8, %12, %cst {dimension_numbers = #tpu.dot_dimension_numbers<[1], [0], [0], [1], [0, 0, 1, 1], [], []>} : vector<64x64xbf16>, vector<64x128xbf16>, vector<64x128xf32> -> vector<64x128xf32>
    %c0_4 = arith.constant 0 : index
    %c0_5 = arith.constant 0 : index
    %c0_6 = arith.constant 0 : index
    %14 = vector.load %arg5[%c0_4, %c0_5, %c0_6] : memref<1x1x128xf32, #tpu.memory_space<vmem>>, vector<1x1x128xf32>
    %15 = vector.shape_cast %14 : vector<1x1x128xf32> to vector<1x128xf32>
    %16 = vector.broadcast %15 : vector<1x128xf32> to vector<64x128xf32>
    %17 = arith.addf %13, %16 : vector<64x128xf32>
    %c0_i32_7 = arith.constant 0 : i32
    %18 = arith.cmpi eq, %arg0, %c0_i32_7 : i32
    %19 = arith.extui %18 : i1 to i32
    %c0_i32_8 = arith.constant 0 : i32
    %20 = arith.cmpi ne, %19, %c0_i32_8 : i32
    scf.if %20 {
      %cst_12 = arith.constant 0.000000e+00 : f32
      %27 = vector.broadcast %cst_12 : f32 to vector<64x128xf32>
      %28 = arith.maximumf %17, %27 : vector<64x128xf32>
      %29 = arith.truncf %28 : vector<64x128xf32> to vector<64x128xbf16>
      %c0_13 = arith.constant 0 : index
      %c0_14 = arith.constant 0 : index
      %c0_15 = arith.constant 0 : index
      %30 = vector.load %arg6[%c0_13, %c0_14, %c0_15] : memref<1x64x128xbf16, #tpu.memory_space<vmem>>, vector<1x64x128xbf16>
      %31 = vector.shape_cast %30 : vector<1x64x128xbf16> to vector<64x128xbf16>
      %32 = vector.shape_cast %29 : vector<64x128xbf16> to vector<1x64x128xbf16>
      tpu.vector_store %arg6[%c0_13, %c0_14, %c0_15], %32 {strides = array<i32>} : memref<1x64x128xbf16, #tpu.memory_space<vmem>>, vector<1x64x128xbf16>,
      %33 = arith.truncf %28 : vector<64x128xf32> to vector<64x128xbf16>
      %c0_16 = arith.constant 0 : index
      %c0_17 = arith.constant 0 : index
      %c0_18 = arith.constant 0 : index
      %34 = vector.load %arg4[%c0_16, %c0_17, %c0_18] : memref<2x128x128xbf16, #tpu.memory_space<vmem>>, vector<1x128x128xbf16>
      %35 = vector.shape_cast %34 : vector<1x128x128xbf16> to vector<128x128xbf16>
      %cst_19 = arith.constant dense<0.000000e+00> : vector<64x128xf32>
      %36 = tpu.matmul %33, %35, %cst_19 {dimension_numbers = #tpu.dot_dimension_numbers<[1], [0], [0], [1], [0, 0, 1, 1], [], []>} : vector<64x128xbf16>, vector<128x128xbf16>, vector<64x128xf32> -> vector<64x128xf32>
      %37 = arith.truncf %36 : vector<64x128xf32> to vector<64x128xbf16>
      %c1 = arith.constant 1 : index
      %38 = arith.index_cast %6 : i32 to index
      %c0_20 = arith.constant 0 : index
      %39 = vector.load %arg7[%c1, %38, %c0_20] : memref<2x64x128xbf16, #tpu.memory_space<vmem>>, vector<1x64x128xbf16>
      %40 = vector.shape_cast %39 : vector<1x64x128xbf16> to vector<64x128xbf16>
      %41 = vector.shape_cast %37 : vector<64x128xbf16> to vector<1x64x128xbf16>
      tpu.vector_store %arg7[%c1, %38, %c0_20], %41 {strides = array<i32>} : memref<2x64x128xbf16, #tpu.memory_space<vmem>>, vector<1x64x128xbf16>,
    } else {
    }
    %c1_i32_9 = arith.constant 1 : i32
    %21 = arith.cmpi eq, %arg0, %c1_i32_9 : i32
    %22 = arith.extui %21 : i1 to i32
    %c0_i32_10 = arith.constant 0 : i32
    %23 = arith.cmpi ne, %22, %c0_i32_10 : i32
    scf.if %23 {
      %27 = arith.truncf %17 : vector<64x128xf32> to vector<64x128xbf16>
      %c0_12 = arith.constant 0 : index
      %c0_13 = arith.constant 0 : index
      %c0_14 = arith.constant 0 : index
      %28 = vector.load %arg6[%c0_12, %c0_13, %c0_14] : memref<1x64x128xbf16, #tpu.memory_space<vmem>>, vector<1x64x128xbf16>
      %29 = vector.shape_cast %28 : vector<1x64x128xbf16> to vector<64x128xbf16>
      %30 = vector.shape_cast %27 : vector<64x128xbf16> to vector<1x64x128xbf16>
      tpu.vector_store %arg6[%c0_12, %c0_13, %c0_14], %30 {strides = array<i32>} : memref<1x64x128xbf16, #tpu.memory_space<vmem>>, vector<1x64x128xbf16>,
      %31 = arith.truncf %17 : vector<64x128xf32> to vector<64x128xbf16>
      %c1 = arith.constant 1 : index
      %c0_15 = arith.constant 0 : index
      %c0_16 = arith.constant 0 : index
      %32 = vector.load %arg4[%c1, %c0_15, %c0_16] : memref<2x128x128xbf16, #tpu.memory_space<vmem>>, vector<1x128x128xbf16>
      %33 = vector.shape_cast %32 : vector<1x128x128xbf16> to vector<128x128xbf16>
      %cst_17 = arith.constant dense<0.000000e+00> : vector<64x128xf32>
      %34 = tpu.matmul %31, %33, %cst_17 {dimension_numbers = #tpu.dot_dimension_numbers<[1], [0], [0], [1], [0, 0, 1, 1], [], []>} : vector<64x128xbf16>, vector<128x128xbf16>, vector<64x128xf32> -> vector<64x128xf32>
      %35 = arith.truncf %34 : vector<64x128xf32> to vector<64x128xbf16>
      %c0_18 = arith.constant 0 : index
      %36 = arith.index_cast %6 : i32 to index
      %c0_19 = arith.constant 0 : index
      %37 = vector.load %arg7[%c0_18, %36, %c0_19] : memref<2x64x128xbf16, #tpu.memory_space<vmem>>, vector<1x64x128xbf16>
      %38 = vector.shape_cast %37 : vector<1x64x128xbf16> to vector<64x128xbf16>
      %39 = vector.shape_cast %35 : vector<64x128xbf16> to vector<1x64x128xbf16>
      tpu.vector_store %arg7[%c0_18, %36, %c0_19], %39 {strides = array<i32>} : memref<2x64x128xbf16, #tpu.memory_space<vmem>>, vector<1x64x128xbf16>,
    } else {
    }
    %c2_i32 = arith.constant 2 : i32
    %24 = arith.cmpi eq, %arg0, %c2_i32 : i32
    %25 = arith.extui %24 : i1 to i32
    %c0_i32_11 = arith.constant 0 : i32
    %26 = arith.cmpi ne, %25, %c0_i32_11 : i32
    scf.if %26 {
      %27 = arith.truncf %17 : vector<64x128xf32> to vector<64x128xbf16>
      %c0_12 = arith.constant 0 : index
      %c0_13 = arith.constant 0 : index
      %c0_14 = arith.constant 0 : index
      %28 = vector.load %arg6[%c0_12, %c0_13, %c0_14] : memref<1x64x128xbf16, #tpu.memory_space<vmem>>, vector<1x64x128xbf16>
      %29 = vector.shape_cast %28 : vector<1x64x128xbf16> to vector<64x128xbf16>
      %30 = vector.shape_cast %27 : vector<64x128xbf16> to vector<1x64x128xbf16>
      tpu.vector_store %arg6[%c0_12, %c0_13, %c0_14], %30 {strides = array<i32>} : memref<1x64x128xbf16, #tpu.memory_space<vmem>>, vector<1x64x128xbf16>,
    } else {
    }
    return
  }
  func.func @transform_0(%arg0: i32, %arg1: i32) -> (i32, i32) {
    %c0_i32 = arith.constant 0 : i32
    %c0_i32_0 = arith.constant 0 : i32
    %c0_i32_1 = arith.constant 0 : i32
    return %c0_i32, %c0_i32_0 : i32, i32
  }
  func.func @transform_1(%arg0: i32, %arg1: i32) -> (i32, i32) {
    %c0_i32 = arith.constant 0 : i32
    %c0_i32_0 = arith.constant 0 : i32
    %c0_i32_1 = arith.constant 0 : i32
    return %c0_i32, %c0_i32_0 : i32, i32
  }
  func.func @transform_2(%arg0: i32, %arg1: i32) -> (i32, i32, i32) {
    %c0_i32 = arith.constant 0 : i32
    %c0_i32_0 = arith.constant 0 : i32
    %c0_i32_1 = arith.constant 0 : i32
    %c0_i32_2 = arith.constant 0 : i32
    return %c0_i32, %c0_i32_0, %c0_i32_1 : i32, i32, i32
  }
  func.func @transform_3(%arg0: i32, %arg1: i32) -> (i32, i32, i32) {
    %c0_i32 = arith.constant 0 : i32
    %c0_i32_0 = arith.constant 0 : i32
    %c0_i32_1 = arith.constant 0 : i32
    return %arg0, %c0_i32, %c0_i32_0 : i32, i32, i32
  }
  func.func @transform_4(%arg0: i32, %arg1: i32) -> (i32, i32, i32) {
    %c0_i32 = arith.constant 0 : i32
    %c0_i32_0 = arith.constant 0 : i32
    return %arg0, %arg1, %c0_i32 : i32, i32, i32
  }
}

</mosaic_0001>

<llo_original>
// kernel: cwgcn_forward.1
$region0: #{cwgcn_forward.1}
  #allocation0 [shape = 'u32[]', space=smem, size = 0x4, offset = 0x4, fixed_abs, tag = 'smem constant byte address 0x4 - core index']
  #allocation1 [shape = 'u32[144,128]{1,0:T(1,128)}', space=vmem, size = 0x12000, scoped, tag = 'internal scratch']
  #allocation2 [shape = 'bf16[2,64,128]{2,1,0:T(16,128)(2,1)}', space=vmem, size = 0x8000, scoped, tag = 'scratch operand']
  %s0 = inlined_call_operand.vmem [shape: bf16[64,64], index: 0, kind: input, shape index: {}]
  %s1 = inlined_call_operand.vmem [shape: bf16[64,128], index: 1, kind: input, shape index: {}]
  %s2 = inlined_call_operand.vmem [shape: bf16[2,128,128], index: 2, kind: input, shape index: {}]
  %s3 = inlined_call_operand.vmem [shape: f32[3,1,128], index: 3, kind: input, shape index: {}]
  %s4 = inlined_call_operand.vmem [shape: bf16[3,64,128], index: 4, kind: output, shape index: {}]
  %s5 = sld [smem:[#allocation0]]
  $region65: #{cwgcn_forward.1} parent=0
    _
  %s7 = ssub.s32 1, %s5
  %s8 = scalar_select 0, %s7, %s5
  loop: start=0, step=1, limit=5
  $region2: #{cwgcn_forward.1} parent=0 // loop_pre_header
    _
  $region3: #{cwgcn_forward.1} parent=0 // loop_header
    %s10 = sphi 0, %s14
    %p11 = scmp.ge.s32.totalorder %s10, 5
    %s17 = sphi 0, %s29
    %s18 = sphi 0, %s25
    %s19 = sphi 0, %s17
    %s20 = sphi 0, %s18
    %s21 = sphi 0, %s19
    %s22 = sphi 0, %s20
    %s30 = sphi 0, %s30
    %s32 = sphi 0, %s30
    %s33 = sphi 0, %s32
    %s47 = sphi 0, %s33
    %s51 = sphi 0, %s51
    %s53 = sphi 0, %s51
    %s54 = sphi 0, %s53
    %s68 = sphi 0, %s54
    %s72 = sphi 0, %s72
    %s74 = sphi 0, %s72
    %s75 = sphi 0, %s74
    %s89 = sphi 0, %s75
    %s95 = sphi 0, %s97
    %s98 = sphi 0, %s95
    %s99 = sphi 0, %s98
    %s115 = sphi 0, %s99
    %s123 = sphi 0, %s125
    %s126 = sphi 0, %s123
    %s127 = sphi 0, %s126
    %s143 = sphi 0, %s127
  $region4: #{cwgcn_forward.1} parent=0 // loop_header_branch
    %13 = sbr.rel (%p11) target = $region8
  $region5: #{cwgcn_forward.1} parent=0 // loop_body
    %s15 = ssub.s32 %s10, 1
    %s16 = ssub.s32 %s10, 2
    %s23 = sadd.s32 1, %s18
    %p24 = scmp.ge.s32.totalorder %s23, 1
    %s25 = scalar_select %p24, 0, %s23
    %s26 = sadd.s32 1, %s17
    %s27 = scalar_select %p24, %s26, %s17
    %p28 = scmp.ge.s32.totalorder %s27, 3
    %s29 = scalar_select %p28, 0, %s27
    %s31 = sadd.s32 %s30, 1
    %p34 = scmp.eq.s32.totalorder %s10, 2
    %p35 = scmp.ne.s32.totalorder %s30, %s32
    %p36 = scmp.eq.s32.totalorder %s10, 0
    %p37 = por %p35, %p36
    %p38 = scmp.ne.s32.totalorder %s30, %s32
    %p39 = scmp.eq.s32.totalorder %s15, 2
    %p40 = por %p38, %p39
    %p41 = scmp.ne.s32.totalorder %s32, %s33
    %p42 = scmp.eq.s32.totalorder %s15, 0
    %p43 = por %p41, %p42
    %p44 = scmp.ne.s32.totalorder %s32, %s33
    %p45 = scmp.eq.s32.totalorder %s16, 2
    %p46 = por %p44, %p45
    %p48 = scmp.ne.s32.totalorder %s33, %s47
    %p49 = scmp.eq.s32.totalorder %s16, 0
    %p50 = por %p48, %p49
    %s52 = sadd.s32 %s51, 1
    %p55 = scmp.eq.s32.totalorder %s10, 2
    %p56 = scmp.ne.s32.totalorder %s51, %s53
    %p57 = scmp.eq.s32.totalorder %s10, 0
    %p58 = por %p56, %p57
    %p59 = scmp.ne.s32.totalorder %s51, %s53
    %p60 = scmp.eq.s32.totalorder %s15, 2
    %p61 = por %p59, %p60
    %p62 = scmp.ne.s32.totalorder %s53, %s54
    %p63 = scmp.eq.s32.totalorder %s15, 0
    %p64 = por %p62, %p63
    %p65 = scmp.ne.s32.totalorder %s53, %s54
    %p66 = scmp.eq.s32.totalorder %s16, 2
    %p67 = por %p65, %p66
    %p69 = scmp.ne.s32.totalorder %s54, %s68
    %p70 = scmp.eq.s32.totalorder %s16, 0
    %p71 = por %p69, %p70
    %s73 = sadd.s32 %s72, 1
    %p76 = scmp.eq.s32.totalorder %s10, 2
    %p77 = scmp.ne.s32.totalorder %s72, %s74
    %p78 = scmp.eq.s32.totalorder %s10, 0
    %p79 = por %p77, %p78
    %p80 = scmp.ne.s32.totalorder %s72, %s74
    %p81 = scmp.eq.s32.totalorder %s15, 2
    %p82 = por %p80, %p81
    %p83 = scmp.ne.s32.totalorder %s74, %s75
    %p84 = scmp.eq.s32.totalorder %s15, 0
    %p85 = por %p83, %p84
    %p86 = scmp.ne.s32.totalorder %s74, %s75
    %p87 = scmp.eq.s32.totalorder %s16, 2
    %p88 = por %p86, %p87
    %p90 = scmp.ne.s32.totalorder %s75, %s89
    %p91 = scmp.eq.s32.totalorder %s16, 0
    %p92 = por %p90, %p91
    %s93 = ssub.s32 %s17, %s29
    %p94 = scmp.eq.s32.totalorder %s93, 0
    %s96 = sadd.s32 %s95, 1
    %s97 = scalar_select %p94, %s95, %s96
    %p100 = pneg %p94
    %p101 = scmp.eq.s32.totalorder %s10, 2
    %p102 = por %p100, %p101
    %p103 = scmp.ne.s32.totalorder %s95, %s98
    %p104 = scmp.eq.s32.totalorder %s10, 0
    %p105 = por %p103, %p104
    %p106 = scmp.ne.s32.totalorder %s95, %s98
    %p107 = scmp.eq.s32.totalorder %s15, 2
    %p108 = por %p106, %p107
    %p109 = scmp.ne.s32.totalorder %s98, %s99
    %p110 = scmp.eq.s32.totalorder %s15, 0
    %p111 = por %p109, %p110
    %p112 = scmp.ne.s32.totalorder %s98, %s99
    %p113 = scmp.eq.s32.totalorder %s16, 2
    %p114 = por %p112, %p113
    %p116 = scmp.ne.s32.totalorder %s99, %s115
    %p117 = scmp.eq.s32.totalorder %s16, 0
    %p118 = por %p116, %p117
    %s119 = ssub.s32 %s17, %s29
    %s120 = ssub.s32 %s18, %s25
    %s121 = sor.u32 %s119, %s120
    %p122 = scmp.eq.s32.totalorder %s121, 0
    %s124 = sadd.s32 %s123, 1
    %s125 = scalar_select %p122, %s123, %s124
    %p128 = pneg %p122
    %p129 = scmp.eq.s32.totalorder %s10, 2
    %p130 = por %p128, %p129
    %p131 = scmp.ne.s32.totalorder %s123, %s126
    %p132 = scmp.eq.s32.totalorder %s10, 0
    %p133 = por %p131, %p132
    %p134 = scmp.ne.s32.totalorder %s123, %s126
    %p135 = scmp.eq.s32.totalorder %s15, 2
    %p136 = por %p134, %p135
    %p137 = scmp.ne.s32.totalorder %s126, %s127
    %p138 = scmp.eq.s32.totalorder %s15, 0
    %p139 = por %p137, %p138
    %p140 = scmp.ne.s32.totalorder %s126, %s127
    %p141 = scmp.eq.s32.totalorder %s16, 2
    %p142 = por %p140, %p141
    %p144 = scmp.ne.s32.totalorder %s127, %s143
    %p145 = scmp.eq.s32.totalorder %s16, 0
    %p146 = por %p144, %p145
    %p147 = scmp.le.s32.totalorder 1, %s10
    %p148 = scmp.lt.s32.totalorder %s10, 4
    %p149 = pnand %p147, %p148
    %p150 = pneg %p149
    // Predicated region
    $region9: #{cwgcn_forward.1} parent=5 // pred_check
      _
    $region10: #{cwgcn_forward.1} parent=5 // pred_check_branch
      %152 = sbr.rel (%p149) target = $region12
    $region11: #{cwgcn_forward.1} parent=5 // pred_region
      %s153 = ssub.s32 %s10, 1
      // Predicated region
      $region13: #{cwgcn_forward.1} parent=11 // pred_check
        %p154 = pneg %p43
      $region14: #{cwgcn_forward.1} parent=11 // pred_check_branch
        %156 = sbr.rel (%p154) target = $region16
      $region15: #{cwgcn_forward.1} parent=11 // pred_region
        _
      $region16: #{cwgcn_forward.1} parent=11 // pred_fallthru
        _
      // Predicated region
      $region17: #{cwgcn_forward.1} parent=11 // pred_check
        %p157 = pneg %p64
      $region18: #{cwgcn_forward.1} parent=11 // pred_check_branch
        %159 = sbr.rel (%p157) target = $region20
      $region19: #{cwgcn_forward.1} parent=11 // pred_region
        _
      $region20: #{cwgcn_forward.1} parent=11 // pred_fallthru
        _
      // Predicated region
      $region21: #{cwgcn_forward.1} parent=11 // pred_check
        %p160 = pneg %p85
      $region22: #{cwgcn_forward.1} parent=11 // pred_check_branch
        %162 = sbr.rel (%p160) target = $region24
      $region23: #{cwgcn_forward.1} parent=11 // pred_region
        _
      $region24: #{cwgcn_forward.1} parent=11 // pred_fallthru
        _
    $region12: #{cwgcn_forward.1} parent=5 // pred_fallthru
      _
    %p163 = scmp.lt.s32.totalorder %s10, 3
    // Predicated region
    $region25: #{cwgcn_forward.1} parent=5 // pred_check
      %p164 = pneg %p163
    $region26: #{cwgcn_forward.1} parent=5 // pred_check_branch
      %166 = sbr.rel (%p164) target = $region28
    $region27: #{cwgcn_forward.1} parent=5 // pred_region
      // Predicated region
      $region29: #{cwgcn_forward.1} parent=27 // pred_check
        %p167 = pneg %p105
      $region30: #{cwgcn_forward.1} parent=27 // pred_check_branch
        %169 = sbr.rel (%p167) target = $region32
      $region31: #{cwgcn_forward.1} parent=27 // pred_region
        %p170 = scmp.lt.s32.totalorder %s17, 2
        %s171 = scalar_select %p170, %s17, 2
        %s172 = scalar_lea.vmem %s3, %s171
      $region32: #{cwgcn_forward.1} parent=27 // pred_fallthru
        _
    $region28: #{cwgcn_forward.1} parent=5 // pred_fallthru
      _
    %p173 = scmp.le.s32.totalorder 1, %s10
    %p174 = scmp.lt.s32.totalorder %s10, 4
    %p175 = pnand %p173, %p174
    %p176 = pneg %p175
    // Predicated region
    $region33: #{cwgcn_forward.1} parent=5 // pred_check
      _
    $region34: #{cwgcn_forward.1} parent=5 // pred_check_branch
      %178 = sbr.rel (%p175) target = $region36
    $region35: #{cwgcn_forward.1} parent=5 // pred_region
      %s179 = ssub.s32 %s10, 1
      %p180 = pneg %p43
      %p181 = pneg %p40
      %p182 = pneg %p64
      %p183 = pneg %p61
      %p184 = pneg %p85
      %p185 = pneg %p82
      %p186 = scmp.lt.s32.totalorder %s19, 2
      %s187 = scalar_select %p186, %s19, 2
      %s188 = scalar_lea.vmem %s3, %s187
      %p189 = pneg %p111
      %p190 = pneg %p108
      %p191 = pneg %p139
      %p192 = pneg %p136
      %s193 = smul.u32 8, %s20
      %p194 = scmp.lt.s32.totalorder %s19, 2
      %s195 = scalar_select %p194, %s19, 2
      %p196 = scmp.lt.s32.totalorder %s193, 7
      %s197 = scalar_select %p196, %s193, 7
      %s198 = smul.addr %s195, 8
      %s199 = sadd.s32 %s197, %s198
      %s200 = smul.addr %s199, 4
      %s201 = scalar_lea.vmem %s4, %s200
      %p202 = scmp.lt.s32.totalorder %s19, 2
      %s203 = scalar_select %p202, %s19, 2
      %s204 = scalar_lea.vmem %s3, %s203
      %s205 = smul.u32 8, %s20
      %p206 = scmp.lt.s32.totalorder %s19, 2
      %s207 = scalar_select %p206, %s19, 2
      %p208 = scmp.lt.s32.totalorder %s205, 7
      %s209 = scalar_select %p208, %s205, 7
      %s210 = smul.addr %s207, 8
      %s211 = sadd.s32 %s209, %s210
      %s212 = smul.addr %s211, 4
      %s213 = scalar_lea.vmem %s4, %s212
      %s214 = smul.u32 8, %s20
      %p216 = scmp.eq.s32.totalorder %s19, 0
      %p217 = scmp.eq.s32.totalorder %s20, 0
      %p218 = pnand %p216, %p217
      %p219 = pneg %p218
      // Predicated region
      $region37: #{cwgcn_forward.1} parent=35 // pred_check
        _
      $region38: #{cwgcn_forward.1} parent=35 // pred_check_branch
        %221 = sbr.rel (%p218) target = $region40
      $region39: #{cwgcn_forward.1} parent=35 // pred_region
        %v222 = vld [vmem:[%s1] sm:$0xf]
        %v223 = vld [vmem:[%s1 + $0x4] sm:$0xf]
        %v224 = vld [vmem:[%s1 + $0x8] sm:$0xf]
        %v225 = vld [vmem:[%s1 + $0xc] sm:$0xf]
        %v226 = vld [vmem:[%s1 + $0x10] sm:$0xf]
        %v227 = vld [vmem:[%s1 + $0x14] sm:$0xf]
        %v228 = vld [vmem:[%s1 + $0x18] sm:$0xf]
        %v229 = vld [vmem:[%s1 + $0x1c] sm:$0xf]
        %v238 = vunpack.c.l.b16 %v222
        %v239 = vunpack.c.l.b16 %v223
        %v240 = vunpack.c.l.b16 %v224
        %v241 = vunpack.c.l.b16 %v225
        %v242 = vunpack.c.l.b16 %v226
        %v243 = vunpack.c.l.b16 %v227
        %v244 = vunpack.c.l.b16 %v228
        %v245 = vunpack.c.l.b16 %v229
        %v246 = vpack.c.b16 %v239, %v238
        %v247 = vpack.c.b16 %v241, %v240
        %v248 = vpack.c.b16 %v243, %v242
        %v249 = vpack.c.b16 %v245, %v244
        %254 = vst [vmem:[#allocation2] sm:$0xff] %v246
        %255 = vst [vmem:[#allocation2 + $0x8] sm:$0xff] %v247
        %256 = vst [vmem:[#allocation2 + $0x10] sm:$0xff] %v248
        %257 = vst [vmem:[#allocation2 + $0x18] sm:$0xff] %v249
      $region40: #{cwgcn_forward.1} parent=35 // pred_fallthru
        _
      %s258 = smul.u32 %s20, 64
      %s259 = sshra.s32 %s258, 3
      %s260 = sand.u32 %s258, 7
      %s261 = smul.addr %s259, 4
      %s262 = scalar_lea.vmem %s0, %s261
      %v263 = vld [vmem:[%s262] sm:$0xf]
      %v264 = vld [vmem:[%s262 + $0x4] sm:$0xf]
      %v265 = vld [vmem:[%s262 + $0x8] sm:$0xf]
      %v266 = vld [vmem:[%s262 + $0xc] sm:$0xf]
      %v267 = vld [vmem:[%s262 + $0x10] sm:$0xf]
      %v268 = vld [vmem:[%s262 + $0x14] sm:$0xf]
      %v269 = vld [vmem:[%s262 + $0x18] sm:$0xf]
      %v270 = vld [vmem:[%s262 + $0x1c] sm:$0xf]
      %s271 = sand.u32 %s19, 1
      %s272 = smul.u32 %s271, 4
      %s273 = smul.addr %s272, 8
      %s274 = scalar_lea.vmem [#allocation2], %s273
      %v275 = vld [vmem:[%s274] sm:$0xff]
      %v276 = vld [vmem:[%s274 + $0x8] sm:$0xff]
      %v277 = vld [vmem:[%s274 + $0x10] sm:$0xff]
      %v278 = vld [vmem:[%s274 + $0x18] sm:$0xff]
      %v279 = vld [vmem:[%s204] sm:$0x1]
      %v281 = vlaneseq
      %v282 = vshrl.u32 %v281, 7
      %v283 = vsub.s32 0, %v282
      %v284 = vrot.slane %v279, %v283
      %v294 = vunpack.c.l.b16 %v263
      %v295 = vunpack.c.l.b16 %v264
      %v296 = vunpack.c.l.b16 %v265
      %v297 = vunpack.c.l.b16 %v266
      %v298 = vunpack.c.l.b16 %v267
      %v299 = vunpack.c.l.b16 %v268
      %v300 = vunpack.c.l.b16 %v269
      %v301 = vunpack.c.l.b16 %v270
      %v302 = vpack.c.b16 %v295, %v294
      %v303 = vpack.c.b16 %v297, %v296
      %v304 = vpack.c.b16 %v299, %v298
      %v305 = vpack.c.b16 %v301, %v300
      %vm306 = vcmask 523264
      %v308 = vsel %vm306, %v302, 0
      %v311 = vsel %vm306, %v303, 0
      %v314 = vsel %vm306, %v304, 0
      %v317 = vsel %vm306, %v305, 0
      %319 = vmatprep.subr.bf16.mxu0 0
      %320 = vmatpush1.bf16.msra.mxu0 %v275
      %321 = vmatprep.subr.bf16.mxu0 0
      %322 = vmatpush1.bf16.msra.mxu0 %v276
      %323 = vmatprep.subr.bf16.mxu0 0
      %324 = vmatpush1.bf16.msra.mxu0 %v277
      %325 = vmatprep.subr.bf16.mxu0 0
      %326 = vmatpush1.bf16.msra.mxu0 %v278
      %327 = vmatprep.subr.bf16.mxu0 0
      %328 = vmatpush1.bf16.msra.mxu0 0
      %329 = vmatprep.subr.bf16.mxu0 0
      %330 = vmatpush1.bf16.msra.mxu0 0
      %331 = vmatprep.subr.bf16.mxu0 0
      %332 = vmatpush1.bf16.msra.mxu0 0
      %333 = vmatprep.subr.bf16.mxu0 0
      %334 = vmatpush1.bf16.msra.mxu0 0
      %335 = vmatprep.subr.bf16.mxu0 0
      %336 = vmatpush1.bf16.msra.mxu0 0
      %337 = vmatprep.subr.bf16.mxu0 0
      %338 = vmatpush1.bf16.msra.mxu0 0
      %339 = vmatprep.subr.bf16.mxu0 0
      %340 = vmatpush1.bf16.msra.mxu0 0
      %341 = vmatprep.subr.bf16.mxu0 0
      %342 = vmatpush1.bf16.msra.mxu0 0
      %343 = vmatprep.subr.bf16.mxu0 0
      %344 = vmatpush1.bf16.msra.mxu0 0
      %345 = vmatprep.subr.bf16.mxu0 0
      %346 = vmatpush1.bf16.msra.mxu0 0
      %347 = vmatprep.subr.bf16.mxu0 0
      %348 = vmatpush1.bf16.msra.mxu0 0
      %349 = vmatprep.subr.bf16.mxu0 0
      %350 = vmatpush1.bf16.msra.mxu0 0
      %351 = vmatprep.mubr.bf16.mxu0 0
      %352 = vmatmul.mubr.bf16.gmra.mrb[0].mxu0 %v308
      %v353 = vpop.f32.mrb[0].mxu0
      %v354 = vadd.f32 %v284, %v353
      %v355 = vpop.f32.mrb[0].mxu0
      %v356 = vpop.f32.mrb[0].mxu0
      %v357 = vadd.f32 %v284, %v356
      %v358 = vpop.f32.mrb[0].mxu0
      %359 = vmatprep.mubr.bf16.mxu0 0
      %360 = vmatmul.mubr.bf16.gmra.mrb[0].mxu0 %v311
      %v361 = vpop.f32.mrb[0].mxu0
      %v362 = vadd.f32 %v284, %v361
      %v363 = vpop.f32.mrb[0].mxu0
      %v364 = vpop.f32.mrb[0].mxu0
      %v365 = vadd.f32 %v284, %v364
      %v366 = vpop.f32.mrb[0].mxu0
      %367 = vmatprep.mubr.bf16.mxu0 0
      %368 = vmatmul.mubr.bf16.gmra.mrb[0].mxu0 %v314
      %v369 = vpop.f32.mrb[0].mxu0
      %v370 = vadd.f32 %v284, %v369
      %v371 = vpop.f32.mrb[0].mxu0
      %v372 = vpop.f32.mrb[0].mxu0
      %v373 = vadd.f32 %v284, %v372
      %v374 = vpop.f32.mrb[0].mxu0
      %375 = vmatprep.mubr.bf16.mxu0 0
      %376 = vmatmul.mubr.bf16.gmra.mrb[0].mxu0 %v317
      %v377 = vpop.f32.mrb[0].mxu0
      %v378 = vadd.f32 %v284, %v377
      %v379 = vpop.f32.mrb[0].mxu0
      %v380 = vpop.f32.mrb[0].mxu0
      %v381 = vadd.f32 %v284, %v380
      %v382 = vpop.f32.mrb[0].mxu0
      %383 = vdwg.mxu0
      // Predicated region
      $region41: #{cwgcn_forward.1} parent=35 // pred_check
        %p384 = pneg %p216
      $region42: #{cwgcn_forward.1} parent=35 // pred_check_branch
        %386 = sbr.rel (%p384) target = $region44
      $region43: #{cwgcn_forward.1} parent=35 // pred_region
        %v387 = vmax.f32 %v354, 0.0
        %v388 = vmax.f32 %v357, 0.0
        %v389 = vmax.f32 %v362, 0.0
        %v390 = vmax.f32 %v365, 0.0
        %v391 = vmax.f32 %v370, 0.0
        %v392 = vmax.f32 %v373, 0.0
        %v393 = vmax.f32 %v378, 0.0
        %v394 = vmax.f32 %v381, 0.0
        %v395 = vpack.c.bf16 %v388, %v387
        %v396 = vpack.c.bf16 %v390, %v389
        %v397 = vpack.c.bf16 %v392, %v391
        %v398 = vpack.c.bf16 %v394, %v393
        %v403 = vunpack.c.l.b16 %v395
        %v404 = vunpack.c.h.b16 %v395
        %v405 = vunpack.c.l.b16 %v396
        %v406 = vunpack.c.h.b16 %v396
        %v407 = vunpack.c.l.b16 %v397
        %v408 = vunpack.c.h.b16 %v397
        %v409 = vunpack.c.l.b16 %v398
        %v410 = vunpack.c.h.b16 %v398
        %v411 = vpack.c.b16 %v403, %v403
        %v412 = vpack.c.b16 %v404, %v404
        %v413 = vpack.c.b16 %v405, %v405
        %v414 = vpack.c.b16 %v406, %v406
        %v415 = vpack.c.b16 %v407, %v407
        %v416 = vpack.c.b16 %v408, %v408
        %v417 = vpack.c.b16 %v409, %v409
        %v418 = vpack.c.b16 %v410, %v410
        %427 = vst [vmem:[%s213] sm:$0xf] %v411
        %428 = vst [vmem:[%s213 + $0x4] sm:$0xf] %v412
        %429 = vst [vmem:[%s213 + $0x8] sm:$0xf] %v413
        %430 = vst [vmem:[%s213 + $0xc] sm:$0xf] %v414
        %431 = vst [vmem:[%s213 + $0x10] sm:$0xf] %v415
        %432 = vst [vmem:[%s213 + $0x14] sm:$0xf] %v416
        %433 = vst [vmem:[%s213 + $0x18] sm:$0xf] %v417
        %434 = vst [vmem:[%s213 + $0x1c] sm:$0xf] %v418
        %v435 = vld [vmem:[%s2] sm:$0xf]
        %v436 = vld [vmem:[%s2 + $0x4] sm:$0xf]
        %v437 = vld [vmem:[%s2 + $0x8] sm:$0xf]
        %v438 = vld [vmem:[%s2 + $0xc] sm:$0xf]
        %v439 = vld [vmem:[%s2 + $0x10] sm:$0xf]
        %v440 = vld [vmem:[%s2 + $0x14] sm:$0xf]
        %v441 = vld [vmem:[%s2 + $0x18] sm:$0xf]
        %v442 = vld [vmem:[%s2 + $0x1c] sm:$0xf]
        %v443 = vld [vmem:[%s2 + $0x20] sm:$0xf]
        %v444 = vld [vmem:[%s2 + $0x24] sm:$0xf]
        %v445 = vld [vmem:[%s2 + $0x28] sm:$0xf]
        %v446 = vld [vmem:[%s2 + $0x2c] sm:$0xf]
        %v447 = vld [vmem:[%s2 + $0x30] sm:$0xf]
        %v448 = vld [vmem:[%s2 + $0x34] sm:$0xf]
        %v449 = vld [vmem:[%s2 + $0x38] sm:$0xf]
        %v450 = vld [vmem:[%s2 + $0x3c] sm:$0xf]
        %v467 = vunpack.c.l.b16 %v435
        %v468 = vunpack.c.l.b16 %v436
        %v469 = vunpack.c.l.b16 %v437
        %v470 = vunpack.c.l.b16 %v438
        %v471 = vunpack.c.l.b16 %v439
        %v472 = vunpack.c.l.b16 %v440
        %v473 = vunpack.c.l.b16 %v441
        %v474 = vunpack.c.l.b16 %v442
        %v475 = vunpack.c.l.b16 %v443
        %v476 = vunpack.c.l.b16 %v444
        %v477 = vunpack.c.l.b16 %v445
        %v478 = vunpack.c.l.b16 %v446
        %v479 = vunpack.c.l.b16 %v447
        %v480 = vunpack.c.l.b16 %v448
        %v481 = vunpack.c.l.b16 %v449
        %v482 = vunpack.c.l.b16 %v450
        %v483 = vpack.c.b16 %v468, %v467
        %v484 = vpack.c.b16 %v470, %v469
        %v485 = vpack.c.b16 %v472, %v471
        %v486 = vpack.c.b16 %v474, %v473
        %v487 = vpack.c.b16 %v476, %v475
        %v488 = vpack.c.b16 %v478, %v477
        %v489 = vpack.c.b16 %v480, %v479
        %v490 = vpack.c.b16 %v482, %v481
        %499 = vmatprep.subr.bf16.mxu0 0
        %500 = vmatpush1.bf16.msra.mxu0 %v483
        %501 = vmatprep.subr.bf16.mxu0 0
        %502 = vmatpush1.bf16.msra.mxu0 %v484
        %503 = vmatprep.subr.bf16.mxu0 0
        %504 = vmatpush1.bf16.msra.mxu0 %v485
        %505 = vmatprep.subr.bf16.mxu0 0
        %506 = vmatpush1.bf16.msra.mxu0 %v486
        %507 = vmatprep.subr.bf16.mxu0 0
        %508 = vmatpush1.bf16.msra.mxu0 %v487
        %509 = vmatprep.subr.bf16.mxu0 0
        %510 = vmatpush1.bf16.msra.mxu0 %v488
        %511 = vmatprep.subr.bf16.mxu0 0
        %512 = vmatpush1.bf16.msra.mxu0 %v489
        %513 = vmatprep.subr.bf16.mxu0 0
        %514 = vmatpush1.bf16.msra.mxu0 %v490
        %515 = vmatprep.subr.bf16.mxu0 0
        %516 = vmatpush1.bf16.msra.mxu0 0
        %517 = vmatprep.subr.bf16.mxu0 0
        %518 = vmatpush1.bf16.msra.mxu0 0
        %519 = vmatprep.subr.bf16.mxu0 0
        %520 = vmatpush1.bf16.msra.mxu0 0
        %521 = vmatprep.subr.bf16.mxu0 0
        %522 = vmatpush1.bf16.msra.mxu0 0
        %523 = vmatprep.subr.bf16.mxu0 0
        %524 = vmatpush1.bf16.msra.mxu0 0
        %525 = vmatprep.subr.bf16.mxu0 0
        %526 = vmatpush1.bf16.msra.mxu0 0
        %527 = vmatprep.subr.bf16.mxu0 0
        %528 = vmatpush1.bf16.msra.mxu0 0
        %529 = vmatprep.subr.bf16.mxu0 0
        %530 = vmatpush1.bf16.msra.mxu0 0
        %531 = vmatprep.mubr.bf16.mxu0 0
        %532 = vmatmul.mubr.bf16.gmra.mrb[0].mxu0 %v395
        %v533 = vpop.f32.mrb[0].mxu0
        %v534 = vadd.f32 0.0, %v533
        %v535 = vpop.f32.mrb[0].mxu0
        %v536 = vpop.f32.mrb[0].mxu0
        %v537 = vadd.f32 0.0, %v536
        %v538 = vpop.f32.mrb[0].mxu0
        %539 = vmatprep.mubr.bf16.mxu0 0
        %540 = vmatmul.mubr.bf16.gmra.mrb[0].mxu0 %v396
        %v541 = vpop.f32.mrb[0].mxu0
        %v542 = vadd.f32 0.0, %v541
        %v543 = vpop.f32.mrb[0].mxu0
        %v544 = vpop.f32.mrb[0].mxu0
        %v545 = vadd.f32 0.0, %v544
        %v546 = vpop.f32.mrb[0].mxu0
        %547 = vmatprep.mubr.bf16.mxu0 0
        %548 = vmatmul.mubr.bf16.gmra.mrb[0].mxu0 %v397
        %v549 = vpop.f32.mrb[0].mxu0
        %v550 = vadd.f32 0.0, %v549
        %v551 = vpop.f32.mrb[0].mxu0
        %v552 = vpop.f32.mrb[0].mxu0
        %v553 = vadd.f32 0.0, %v552
        %v554 = vpop.f32.mrb[0].mxu0
        %555 = vmatprep.mubr.bf16.mxu0 0
        %556 = vmatmul.mubr.bf16.gmra.mrb[0].mxu0 %v398
        %v557 = vpop.f32.mrb[0].mxu0
        %v558 = vadd.f32 0.0, %v557
        %v559 = vpop.f32.mrb[0].mxu0
        %v560 = vpop.f32.mrb[0].mxu0
        %v561 = vadd.f32 0.0, %v560
        %v562 = vpop.f32.mrb[0].mxu0
        %563 = vdwg.mxu0
        %v564 = vpack.c.bf16 %v537, %v534
        %v565 = vpack.c.bf16 %v545, %v542
        %v566 = vpack.c.bf16 %v553, %v550
        %v567 = vpack.c.bf16 %v561, %v558
        %s568 = sshra.s32 %s258, 4
        %s569 = sand.u32 %s258, 15
        %s570 = sadd.s32 %s568, 4
        %s571 = smul.addr %s570, 8
        %s572 = scalar_lea.vmem [#allocation2], %s571
        %573 = vst [vmem:[%s572] sm:$0xff] %v564
        %574 = vst [vmem:[%s572 + $0x8] sm:$0xff] %v565
        %575 = vst [vmem:[%s572 + $0x10] sm:$0xff] %v566
        %576 = vst [vmem:[%s572 + $0x18] sm:$0xff] %v567
      $region44: #{cwgcn_forward.1} parent=35 // pred_fallthru
        _
      %p577 = scmp.eq.s32.totalorder %s19, 1
      // Predicated region
      $region45: #{cwgcn_forward.1} parent=35 // pred_check
        %p578 = pneg %p577
      $region46: #{cwgcn_forward.1} parent=35 // pred_check_branch
        %580 = sbr.rel (%p578) target = $region48
      $region47: #{cwgcn_forward.1} parent=35 // pred_region
        %v581 = vpack.c.bf16 %v357, %v354
        %v582 = vpack.c.bf16 %v365, %v362
        %v583 = vpack.c.bf16 %v373, %v370
        %v584 = vpack.c.bf16 %v381, %v378
        %v589 = vunpack.c.l.b16 %v581
        %v590 = vunpack.c.h.b16 %v581
        %v591 = vunpack.c.l.b16 %v582
        %v592 = vunpack.c.h.b16 %v582
        %v593 = vunpack.c.l.b16 %v583
        %v594 = vunpack.c.h.b16 %v583
        %v595 = vunpack.c.l.b16 %v584
        %v596 = vunpack.c.h.b16 %v584
        %v597 = vpack.c.b16 %v589, %v589
        %v598 = vpack.c.b16 %v590, %v590
        %v599 = vpack.c.b16 %v591, %v591
        %v600 = vpack.c.b16 %v592, %v592
        %v601 = vpack.c.b16 %v593, %v593
        %v602 = vpack.c.b16 %v594, %v594
        %v603 = vpack.c.b16 %v595, %v595
        %v604 = vpack.c.b16 %v596, %v596
        %613 = vst [vmem:[%s213] sm:$0xf] %v597
        %614 = vst [vmem:[%s213 + $0x4] sm:$0xf] %v598
        %615 = vst [vmem:[%s213 + $0x8] sm:$0xf] %v599
        %616 = vst [vmem:[%s213 + $0xc] sm:$0xf] %v600
        %617 = vst [vmem:[%s213 + $0x10] sm:$0xf] %v601
        %618 = vst [vmem:[%s213 + $0x14] sm:$0xf] %v602
        %619 = vst [vmem:[%s213 + $0x18] sm:$0xf] %v603
        %620 = vst [vmem:[%s213 + $0x1c] sm:$0xf] %v604
        %s621 = scalar_lea.vmem %s2, 64
        %v622 = vld [vmem:[%s621] sm:$0xf]
        %v623 = vld [vmem:[%s621 + $0x4] sm:$0xf]
        %v624 = vld [vmem:[%s621 + $0x8] sm:$0xf]
        %v625 = vld [vmem:[%s621 + $0xc] sm:$0xf]
        %v626 = vld [vmem:[%s621 + $0x10] sm:$0xf]
        %v627 = vld [vmem:[%s621 + $0x14] sm:$0xf]
        %v628 = vld [vmem:[%s621 + $0x18] sm:$0xf]
        %v629 = vld [vmem:[%s621 + $0x1c] sm:$0xf]
        %v630 = vld [vmem:[%s621 + $0x20] sm:$0xf]
        %v631 = vld [vmem:[%s621 + $0x24] sm:$0xf]
        %v632 = vld [vmem:[%s621 + $0x28] sm:$0xf]
        %v633 = vld [vmem:[%s621 + $0x2c] sm:$0xf]
        %v634 = vld [vmem:[%s621 + $0x30] sm:$0xf]
        %v635 = vld [vmem:[%s621 + $0x34] sm:$0xf]
        %v636 = vld [vmem:[%s621 + $0x38] sm:$0xf]
        %v637 = vld [vmem:[%s621 + $0x3c] sm:$0xf]
        %v654 = vunpack.c.l.b16 %v622
        %v655 = vunpack.c.l.b16 %v623
        %v656 = vunpack.c.l.b16 %v624
        %v657 = vunpack.c.l.b16 %v625
        %v658 = vunpack.c.l.b16 %v626
        %v659 = vunpack.c.l.b16 %v627
        %v660 = vunpack.c.l.b16 %v628
        %v661 = vunpack.c.l.b16 %v629
        %v662 = vunpack.c.l.b16 %v630
        %v663 = vunpack.c.l.b16 %v631
        %v664 = vunpack.c.l.b16 %v632
        %v665 = vunpack.c.l.b16 %v633
        %v666 = vunpack.c.l.b16 %v634
        %v667 = vunpack.c.l.b16 %v635
        %v668 = vunpack.c.l.b16 %v636
        %v669 = vunpack.c.l.b16 %v637
        %v670 = vpack.c.b16 %v655, %v654
        %v671 = vpack.c.b16 %v657, %v656
        %v672 = vpack.c.b16 %v659, %v658
        %v673 = vpack.c.b16 %v661, %v660
        %v674 = vpack.c.b16 %v663, %v662
        %v675 = vpack.c.b16 %v665, %v664
        %v676 = vpack.c.b16 %v667, %v666
        %v677 = vpack.c.b16 %v669, %v668
        %686 = vmatprep.subr.bf16.mxu0 0
        %687 = vmatpush1.bf16.msra.mxu0 %v670
        %688 = vmatprep.subr.bf16.mxu0 0
        %689 = vmatpush1.bf16.msra.mxu0 %v671
        %690 = vmatprep.subr.bf16.mxu0 0
        %691 = vmatpush1.bf16.msra.mxu0 %v672
        %692 = vmatprep.subr.bf16.mxu0 0
        %693 = vmatpush1.bf16.msra.mxu0 %v673
        %694 = vmatprep.subr.bf16.mxu0 0
        %695 = vmatpush1.bf16.msra.mxu0 %v674
        %696 = vmatprep.subr.bf16.mxu0 0
        %697 = vmatpush1.bf16.msra.mxu0 %v675
        %698 = vmatprep.subr.bf16.mxu0 0
        %699 = vmatpush1.bf16.msra.mxu0 %v676
        %700 = vmatprep.subr.bf16.mxu0 0
        %701 = vmatpush1.bf16.msra.mxu0 %v677
        %702 = vmatprep.subr.bf16.mxu0 0
        %703 = vmatpush1.bf16.msra.mxu0 0
        %704 = vmatprep.subr.bf16.mxu0 0
        %705 = vmatpush1.bf16.msra.mxu0 0
        %706 = vmatprep.subr.bf16.mxu0 0
        %707 = vmatpush1.bf16.msra.mxu0 0
        %708 = vmatprep.subr.bf16.mxu0 0
        %709 = vmatpush1.bf16.msra.mxu0 0
        %710 = vmatprep.subr.bf16.mxu0 0
        %711 = vmatpush1.bf16.msra.mxu0 0
        %712 = vmatprep.subr.bf16.mxu0 0
        %713 = vmatpush1.bf16.msra.mxu0 0
        %714 = vmatprep.subr.bf16.mxu0 0
        %715 = vmatpush1.bf16.msra.mxu0 0
        %716 = vmatprep.subr.bf16.mxu0 0
        %717 = vmatpush1.bf16.msra.mxu0 0
        %718 = vmatprep.mubr.bf16.mxu0 0
        %719 = vmatmul.mubr.bf16.gmra.mrb[0].mxu0 %v581
        %v720 = vpop.f32.mrb[0].mxu0
        %v721 = vadd.f32 0.0, %v720
        %v722 = vpop.f32.mrb[0].mxu0
        %v723 = vpop.f32.mrb[0].mxu0
        %v724 = vadd.f32 0.0, %v723
        %v725 = vpop.f32.mrb[0].mxu0
        %726 = vmatprep.mubr.bf16.mxu0 0
        %727 = vmatmul.mubr.bf16.gmra.mrb[0].mxu0 %v582
        %v728 = vpop.f32.mrb[0].mxu0
        %v729 = vadd.f32 0.0, %v728
        %v730 = vpop.f32.mrb[0].mxu0
        %v731 = vpop.f32.mrb[0].mxu0
        %v732 = vadd.f32 0.0, %v731
        %v733 = vpop.f32.mrb[0].mxu0
        %734 = vmatprep.mubr.bf16.mxu0 0
        %735 = vmatmul.mubr.bf16.gmra.mrb[0].mxu0 %v583
        %v736 = vpop.f32.mrb[0].mxu0
        %v737 = vadd.f32 0.0, %v736
        %v738 = vpop.f32.mrb[0].mxu0
        %v739 = vpop.f32.mrb[0].mxu0
        %v740 = vadd.f32 0.0, %v739
        %v741 = vpop.f32.mrb[0].mxu0
        %742 = vmatprep.mubr.bf16.mxu0 0
        %743 = vmatmul.mubr.bf16.gmra.mrb[0].mxu0 %v584
        %v744 = vpop.f32.mrb[0].mxu0
        %v745 = vadd.f32 0.0, %v744
        %v746 = vpop.f32.mrb[0].mxu0
        %v747 = vpop.f32.mrb[0].mxu0
        %v748 = vadd.f32 0.0, %v747
        %v749 = vpop.f32.mrb[0].mxu0
        %750 = vdwg.mxu0
        %v751 = vpack.c.bf16 %v724, %v721
        %v752 = vpack.c.bf16 %v732, %v729
        %v753 = vpack.c.bf16 %v740, %v737
        %v754 = vpack.c.bf16 %v748, %v745
        %s755 = sshra.s32 %s258, 4
        %s756 = sand.u32 %s258, 15
        %s757 = smul.addr %s755, 8
        %s758 = scalar_lea.vmem [#allocation2], %s757
        %759 = vst [vmem:[%s758] sm:$0xff] %v751
        %760 = vst [vmem:[%s758 + $0x8] sm:$0xff] %v752
        %761 = vst [vmem:[%s758 + $0x10] sm:$0xff] %v753
        %762 = vst [vmem:[%s758 + $0x18] sm:$0xff] %v754
      $region48: #{cwgcn_forward.1} parent=35 // pred_fallthru
        _
      %p763 = scmp.eq.s32.totalorder %s19, 2
      // Predicated region
      $region49: #{cwgcn_forward.1} parent=35 // pred_check
        %p764 = pneg %p763
      $region50: #{cwgcn_forward.1} parent=35 // pred_check_branch
        %766 = sbr.rel (%p764) target = $region52
      $region51: #{cwgcn_forward.1} parent=35 // pred_region
        %v767 = vpack.c.bf16 %v357, %v354
        %v768 = vpack.c.bf16 %v365, %v362
        %v769 = vpack.c.bf16 %v373, %v370
        %v770 = vpack.c.bf16 %v381, %v378
        %v775 = vunpack.c.l.b16 %v767
        %v776 = vunpack.c.h.b16 %v767
        %v777 = vunpack.c.l.b16 %v768
        %v778 = vunpack.c.h.b16 %v768
        %v779 = vunpack.c.l.b16 %v769
        %v780 = vunpack.c.h.b16 %v769
        %v781 = vunpack.c.l.b16 %v770
        %v782 = vunpack.c.h.b16 %v770
        %v783 = vpack.c.b16 %v775, %v775
        %v784 = vpack.c.b16 %v776, %v776
        %v785 = vpack.c.b16 %v777, %v777
        %v786 = vpack.c.b16 %v778, %v778
        %v787 = vpack.c.b16 %v779, %v779
        %v788 = vpack.c.b16 %v780, %v780
        %v789 = vpack.c.b16 %v781, %v781
        %v790 = vpack.c.b16 %v782, %v782
        %799 = vst [vmem:[%s213] sm:$0xf] %v783
        %800 = vst [vmem:[%s213 + $0x4] sm:$0xf] %v784
        %801 = vst [vmem:[%s213 + $0x8] sm:$0xf] %v785
        %802 = vst [vmem:[%s213 + $0xc] sm:$0xf] %v786
        %803 = vst [vmem:[%s213 + $0x10] sm:$0xf] %v787
        %804 = vst [vmem:[%s213 + $0x14] sm:$0xf] %v788
        %805 = vst [vmem:[%s213 + $0x18] sm:$0xf] %v789
        %806 = vst [vmem:[%s213 + $0x1c] sm:$0xf] %v790
      $region52: #{cwgcn_forward.1} parent=35 // pred_fallthru
        _
      %s807 = smul.u32 8, %s20
      %p808 = scmp.lt.s32.totalorder %s19, 2
      %s809 = scalar_select %p808, %s19, 2
      %p810 = scmp.lt.s32.totalorder %s807, 7
      %s811 = scalar_select %p810, %s807, 7
      %s812 = smul.addr %s809, 8
      %s813 = sadd.s32 %s811, %s812
      %s814 = smul.addr %s813, 4
      %s815 = scalar_lea.vmem %s4, %s814
      // Predicated region
      $region53: #{cwgcn_forward.1} parent=35 // pred_check
        %p816 = pneg %p136
      $region54: #{cwgcn_forward.1} parent=35 // pred_check_branch
        %818 = sbr.rel (%p816) target = $region56
      $region55: #{cwgcn_forward.1} parent=35 // pred_region
        %s819 = smul.u32 8, %s20
      $region56: #{cwgcn_forward.1} parent=35 // pred_fallthru
        _
    $region36: #{cwgcn_forward.1} parent=5 // pred_fallthru
      _
    %p820 = scmp.le.s32.totalorder 2, %s10
    // Predicated region
    $region57: #{cwgcn_forward.1} parent=5 // pred_check
      %p821 = pneg %p820
    $region58: #{cwgcn_forward.1} parent=5 // pred_check_branch
      %823 = sbr.rel (%p821) target = $region60
    $region59: #{cwgcn_forward.1} parent=5 // pred_region
      %s824 = ssub.s32 %s10, 2
      // Predicated region
      $region61: #{cwgcn_forward.1} parent=59 // pred_check
        %p825 = pneg %p142
      $region62: #{cwgcn_forward.1} parent=59 // pred_check_branch
        %827 = sbr.rel (%p825) target = $region64
      $region63: #{cwgcn_forward.1} parent=59 // pred_region
        %s828 = smul.u32 8, %s22
        %p829 = scmp.lt.s32.totalorder %s21, 2
        %s830 = scalar_select %p829, %s21, 2
        %p831 = scmp.lt.s32.totalorder %s828, 7
        %s832 = scalar_select %p831, %s828, 7
        %s833 = smul.addr %s830, 8
        %s834 = sadd.s32 %s832, %s833
        %s835 = smul.addr %s834, 4
        %s836 = scalar_lea.vmem %s4, %s835
      $region64: #{cwgcn_forward.1} parent=59 // pred_fallthru
        _
    $region60: #{cwgcn_forward.1} parent=5 // pred_fallthru
      _
  $region6: #{cwgcn_forward.1} parent=0 // loop_footer
    %s14 = sadd.s32 1, %s10
  $region7: #{cwgcn_forward.1} parent=0 // loop_footer_branch
    %9 = sbr.rel target = $region3
  $region8: #{cwgcn_forward.1} parent=0 // loop_exit
    _

</llo_original>
